<compile_context>
chip_gen: v5e
topology: v5e:2x2
jax: 0.10.0
libtpu: 0.0.40
codegen_flags: <defaults>
</compile_context>

<pallas_src>
import jax
import jax.numpy as jnp
from jax.experimental import pallas as pl
from jax.experimental.pallas import tpu as pltpu


def updater_kernel(align_ref, hidden_ref, w_ref, b_ref, rep_ref, til_ref,
                   out_ref, proj_ref):
    # TODO(synk): dropout is identity in eval mode; a training-mode variant
    # would draw a mask with pltpu.prng_seed / pltpu.stateful_bernoulli here.

    # Linear projection on the MXU, computed once per B-tile (first N-tile only)
    # and cached in VMEM scratch for the remaining N tiles of this B-tile.
    @pl.when(pl.program_id(1) == 0)
    def _():
        proj_ref[...] = (
            jnp.dot(hidden_ref[...], w_ref[...],
                    preferred_element_type=jnp.float32) + b_ref[...])

    # Lane-dense flattened outer product, built with two tiny MXU matmuls so the
    # store is one full-width slab and no in-kernel reshape/relayout is needed:
    #   a_rep[b, n*E + e]     = alignments[b, n]   (each alignment replicated E times)
    #   proj_tile[b, n*E + e] = proj[b, e]         (projection tiled tN times)
    a_rep = jnp.dot(align_ref[...], rep_ref[...],
                    preferred_element_type=jnp.float32)
    proj_tile = jnp.dot(proj_ref[...], til_ref[...],
                        preferred_element_type=jnp.float32)
    out_ref[...] = a_rep * proj_tile


def _pick_tile(dim, pref, align):
    """Full extent for small / unaligned dims, else an `align`-aligned tile."""
    if dim <= pref or dim % align != 0:
        return dim
    return max(align, (pref // align) * align)


def updater_forward(alignments, hidden, weight_t, bias):
    """alignments [B,N] f32, hidden [B,H] f32, weight_t [H,E] f32, bias [E] f32."""
    B, N = alignments.shape
    H, E = weight_t.shape
    bias2d = bias.reshape(1, E).astype(jnp.float32)

    # Tile sizes.  Second-minor block dims must be multiples of 8 (or full
    # extent), lane dims multiples of 128 (or full extent).
    tb = _pick_tile(B, 256, 8)     # batch tile
    tn = _pick_tile(N, 128, 128)   # char tile
    grid = (pl.cdiv(B, tb), pl.cdiv(N, tn))

    # Constant expansion matrices (resident in VMEM, index_map is constant):
    #   rep[n, n*E + e] = 1   -> alignments @ rep replicates each alignment E times
    #   til[e, n*E + e] = 1   -> proj @ til tiles the projection tn times
    col_n = jnp.arange(tn * E, dtype=jnp.int32) // E
    col_e = jnp.arange(tn * E, dtype=jnp.int32) % E
    rep = (col_n[None, :] == jnp.arange(tn, dtype=jnp.int32)[:, None]
           ).astype(jnp.float32)                                   # [tn, tn*E]
    til = (col_e[None, :] == jnp.arange(E, dtype=jnp.int32)[:, None]
           ).astype(jnp.float32)                                   # [E, tn*E]

    out_flat = pl.pallas_call(
        updater_kernel,
        out_shape=jax.ShapeDtypeStruct((B, N * E), jnp.float32),
        grid_spec=pltpu.PrefetchScalarGridSpec(
            num_scalar_prefetch=0,
            grid=grid,
            in_specs=[
                pl.BlockSpec((tb, tn), lambda bi, nj: (bi, nj)),     # alignments
                pl.BlockSpec((tb, H), lambda bi, nj: (bi, 0)),       # hidden
                pl.BlockSpec((H, E), lambda bi, nj: (0, 0)),         # weight (H,E)
                pl.BlockSpec((1, E), lambda bi, nj: (0, 0)),         # bias
                pl.BlockSpec((tn, tn * E), lambda bi, nj: (0, 0)),   # rep matrix
                pl.BlockSpec((E, tn * E), lambda bi, nj: (0, 0)),    # til matrix
            ],
            out_specs=pl.BlockSpec((tb, tn * E), lambda bi, nj: (bi, nj)),
            scratch_shapes=[pltpu.VMEM((tb, E), jnp.float32)],       # proj cache
        ),
        compiler_params=pltpu.CompilerParams(
            dimension_semantics=("parallel", "arbitrary")),
        cost_estimate=pl.CostEstimate(
            flops=2 * B * H * E + 3 * B * N * E,
            transcendentals=0,
            bytes_accessed=4 * (B * N + B * H + H * E + E + B * N * E)),
    )(alignments, hidden, weight_t, bias2d, rep, til)

    # Cosmetic reshape back to the PyTorch output layout (contiguous, free).
    return out_flat.reshape(B, N, E)


if __name__ == "__main__":
    # hps: sent_hidden_size=16, word_hidden_size=16, char_emb_size=32, dropout=0.1
    B = 2            # batch
    N = 8            # num_char
    H = 16 + 16      # sent_hidden_size + word_hidden_size
    E = 32           # char_emb_size

    key = jax.random.PRNGKey(0)
    k_a, k_h, k_w, k_b = jax.random.split(key, 4)

    alignments = jax.random.normal(k_a, (B, N), dtype=jnp.float32)
    hidden = jax.random.normal(k_h, (B, H), dtype=jnp.float32)

    # Deterministic Linear params (PyTorch-style uniform(-1/sqrt(H), 1/sqrt(H))).
    bound = 1.0 / jnp.sqrt(jnp.float32(H))
    weight = jax.random.uniform(k_w, (E, H), minval=-bound, maxval=bound,
                                dtype=jnp.float32)   # PyTorch layout [E, H]
    bias = jax.random.uniform(k_b, (E,), minval=-bound, maxval=bound,
                              dtype=jnp.float32)
    weight_t = weight.T  # [H, E] for the kernel

    out = updater_forward(alignments, hidden, weight_t, bias)
    out = jax.block_until_ready(out)

    # Pure-JAX reference (dropout is identity in eval mode).
    proj_ref = hidden @ weight_t + bias
    ref = alignments[:, :, None] * proj_ref[:, None, :]
    assert out.shape == (B, N, E)
    assert jnp.allclose(out, ref, atol=1e-5, rtol=1e-5)

    print("KERNEL_OK")
</pallas_src>

<mosaic_0001>
module attributes {stable_mosaic.version = 11 : i64} {
  func.func @updater_kernel(%arg0: i32, %arg1: i32, %arg2: memref<2x8xf32, #tpu.memory_space<vmem>>, %arg3: memref<2x32xf32, #tpu.memory_space<vmem>>, %arg4: memref<32x32xf32, #tpu.memory_space<vmem>>, %arg5: memref<1x32xf32, #tpu.memory_space<vmem>>, %arg6: memref<8x256xf32, #tpu.memory_space<vmem>>, %arg7: memref<32x256xf32, #tpu.memory_space<vmem>>, %arg8: memref<2x256xf32, #tpu.memory_space<vmem>>, %arg9: memref<2x32xf32, #tpu.memory_space<vmem>>) attributes {dimension_semantics = [#tpu.dimension_semantics<parallel>, #tpu.dimension_semantics<arbitrary>], iteration_bounds = array<i64: 1, 1>, scalar_prefetch = 0 : i64, scratch_operands = 1 : i64, tpu.core_type = #tpu.core_type<tc>, window_params = [{transform_indices = @transform_0, window_bounds = array<i64: 2, 8>}, {transform_indices = @transform_1, window_bounds = array<i64: 2, 32>}, {pipeline_mode = #tpu.pipeline_mode<synchronous>, transform_indices = @transform_2, window_bounds = array<i64: 32, 32>}, {pipeline_mode = #tpu.pipeline_mode<synchronous>, transform_indices = @transform_3, window_bounds = array<i64: 1, 32>}, {pipeline_mode = #tpu.pipeline_mode<synchronous>, transform_indices = @transform_4, window_bounds = array<i64: 8, 256>}, {pipeline_mode = #tpu.pipeline_mode<synchronous>, transform_indices = @transform_5, window_bounds = array<i64: 32, 256>}, {transform_indices = @transform_6, window_bounds = array<i64: 2, 256>}]} {
    %c0_i32 = arith.constant 0 : i32
    %0 = arith.cmpi eq, %arg1, %c0_i32 : i32
    %1 = arith.extui %0 : i1 to i32
    %c0_i32_0 = arith.constant 0 : i32
    %2 = arith.cmpi ne, %1, %c0_i32_0 : i32
    scf.if %2 {
      %c0_11 = arith.constant 0 : index
      %c0_12 = arith.constant 0 : index
      %11 = vector.load %arg3[%c0_11, %c0_12] : memref<2x32xf32, #tpu.memory_space<vmem>>, vector<2x32xf32>
      %c0_13 = arith.constant 0 : index
      %c0_14 = arith.constant 0 : index
      %12 = vector.load %arg4[%c0_13, %c0_14] : memref<32x32xf32, #tpu.memory_space<vmem>>, vector<32x32xf32>
      %cst_15 = arith.constant dense<0.000000e+00> : vector<2x32xf32>
      %13 = tpu.matmul %11, %12, %cst_15 {dimension_numbers = #tpu.dot_dimension_numbers<[1], [0], [0], [1], [0, 0, 1, 1], [], []>} : vector<2x32xf32>, vector<32x32xf32>, vector<2x32xf32> -> vector<2x32xf32>
      %c0_16 = arith.constant 0 : index
      %c0_17 = arith.constant 0 : index
      %14 = vector.load %arg5[%c0_16, %c0_17] : memref<1x32xf32, #tpu.memory_space<vmem>>, vector<1x32xf32>
      %15 = vector.broadcast %14 : vector<1x32xf32> to vector<2x32xf32>
      %16 = arith.addf %13, %15 : vector<2x32xf32>
      %c0_18 = arith.constant 0 : index
      %c0_19 = arith.constant 0 : index
      %17 = vector.load %arg9[%c0_18, %c0_19] : memref<2x32xf32, #tpu.memory_space<vmem>>, vector<2x32xf32>
      tpu.vector_store %arg9[%c0_18, %c0_19], %16 {strides = array<i32>} : memref<2x32xf32, #tpu.memory_space<vmem>>, vector<2x32xf32>,
    } else {
    }
    %c0 = arith.constant 0 : index
    %c0_1 = arith.constant 0 : index
    %3 = vector.load %arg2[%c0, %c0_1] : memref<2x8xf32, #tpu.memory_space<vmem>>, vector<2x8xf32>
    %c0_2 = arith.constant 0 : index
    %c0_3 = arith.constant 0 : index
    %4 = vector.load %arg6[%c0_2, %c0_3] : memref<8x256xf32, #tpu.memory_space<vmem>>, vector<8x256xf32>
    %cst = arith.constant dense<0.000000e+00> : vector<2x256xf32>
    %5 = tpu.matmul %3, %4, %cst {dimension_numbers = #tpu.dot_dimension_numbers<[1], [0], [0], [1], [0, 0, 1, 1], [], []>} : vector<2x8xf32>, vector<8x256xf32>, vector<2x256xf32> -> vector<2x256xf32>
    %c0_4 = arith.constant 0 : index
    %c0_5 = arith.constant 0 : index
    %6 = vector.load %arg9[%c0_4, %c0_5] : memref<2x32xf32, #tpu.memory_space<vmem>>, vector<2x32xf32>
    %c0_6 = arith.constant 0 : index
    %c0_7 = arith.constant 0 : index
    %7 = vector.load %arg7[%c0_6, %c0_7] : memref<32x256xf32, #tpu.memory_space<vmem>>, vector<32x256xf32>
    %cst_8 = arith.constant dense<0.000000e+00> : vector<2x256xf32>
    %8 = tpu.matmul %6, %7, %cst_8 {dimension_numbers = #tpu.dot_dimension_numbers<[1], [0], [0], [1], [0, 0, 1, 1], [], []>} : vector<2x32xf32>, vector<32x256xf32>, vector<2x256xf32> -> vector<2x256xf32>
    %9 = arith.mulf %5, %8 : vector<2x256xf32>
    %c0_9 = arith.constant 0 : index
    %c0_10 = arith.constant 0 : index
    %10 = vector.load %arg8[%c0_9, %c0_10] : memref<2x256xf32, #tpu.memory_space<vmem>>, vector<2x256xf32>
    tpu.vector_store %arg8[%c0_9, %c0_10], %9 {strides = array<i32>} : memref<2x256xf32, #tpu.memory_space<vmem>>, vector<2x256xf32>,
    return
  }
  func.func @transform_0(%arg0: i32, %arg1: i32) -> (i32, i32) {
    %c0_i32 = arith.constant 0 : i32
    return %arg0, %arg1 : i32, i32
  }
  func.func @transform_1(%arg0: i32, %arg1: i32) -> (i32, i32) {
    %c0_i32 = arith.constant 0 : i32
    %c0_i32_0 = arith.constant 0 : i32
    return %arg0, %c0_i32 : i32, i32
  }
  func.func @transform_2(%arg0: i32, %arg1: i32) -> (i32, i32) {
    %c0_i32 = arith.constant 0 : i32
    %c0_i32_0 = arith.constant 0 : i32
    %c0_i32_1 = arith.constant 0 : i32
    return %c0_i32, %c0_i32_0 : i32, i32
  }
  func.func @transform_3(%arg0: i32, %arg1: i32) -> (i32, i32) {
    %c0_i32 = arith.constant 0 : i32
    %c0_i32_0 = arith.constant 0 : i32
    %c0_i32_1 = arith.constant 0 : i32
    return %c0_i32, %c0_i32_0 : i32, i32
  }
  func.func @transform_4(%arg0: i32, %arg1: i32) -> (i32, i32) {
    %c0_i32 = arith.constant 0 : i32
    %c0_i32_0 = arith.constant 0 : i32
    %c0_i32_1 = arith.constant 0 : i32
    return %c0_i32, %c0_i32_0 : i32, i32
  }
  func.func @transform_5(%arg0: i32, %arg1: i32) -> (i32, i32) {
    %c0_i32 = arith.constant 0 : i32
    %c0_i32_0 = arith.constant 0 : i32
    %c0_i32_1 = arith.constant 0 : i32
    return %c0_i32, %c0_i32_0 : i32, i32
  }
  func.func @transform_6(%arg0: i32, %arg1: i32) -> (i32, i32) {
    %c0_i32 = arith.constant 0 : i32
    return %arg0, %arg1 : i32, i32
  }
}

</mosaic_0001>

<llo_original>
// kernel: tpu_custom_call.1
$region0: #{tpu_custom_call.1}
  #allocation0 [shape = 'u32[]', space=smem, size = 0x4, offset = 0x4, fixed_abs, tag = 'smem constant byte address 0x4 - core index']
  #allocation1 [shape = 'u32[72,128]{1,0:T(1,128)}', space=vmem, size = 0x9000, scoped, tag = 'internal scratch']
  #allocation2 [shape = 'f32[2,32]{1,0:T(2,128)}', space=vmem, size = 0x400, scoped, tag = 'scratch operand']
  %s0 = inlined_call_operand.hbm [shape: f32[2,8], index: 0, kind: input, shape index: {}]
  %s1 = inlined_call_operand.hbm [shape: f32[2,32], index: 1, kind: input, shape index: {}]
  %s2 = inlined_call_operand.hbm [shape: f32[32,32], index: 2, kind: input, shape index: {}]
  %s3 = inlined_call_operand.vmem [shape: f32[1,32], index: 3, kind: input, shape index: {}]
  %s4 = inlined_call_operand.hbm [shape: f32[8,256], index: 4, kind: input, shape index: {}]
  %s5 = inlined_call_operand.hbm [shape: f32[32,256], index: 5, kind: input, shape index: {}]
  %s6 = inlined_call_operand.hbm [shape: f32[2,256], index: 6, kind: output, shape index: {}]
  %s7 = sld [smem:[#allocation0]]
  $region58: #{tpu_custom_call.1} parent=0
    _
  %s9 = ssub.s32 1, %s7
  %s10 = scalar_select 0, %s9, %s7
  $region1: #{tpu_custom_call.1} parent=0
    #allocation3 [shape = 'u8[1024]{0}', space=vmem, size = 0x400, scoped, tag = 'input window, operand 0, single buffered']
    #allocation4 [shape = 's32[1]{0}', space=sflag, size = 0x4, scoped, tag = 'scoped memory for tpu_custom_call.1']
    #allocation5 [shape = 's32[1]{0}', space=sflag, size = 0x4, scoped, tag = 'scoped memory for tpu_custom_call.1']
    #allocation6 [shape = 'u8[1024]{0}', space=vmem, size = 0x400, scoped, tag = 'input window, operand 1, single buffered']
    #allocation7 [shape = 's32[1]{0}', space=sflag, size = 0x4, scoped, tag = 'scoped memory for tpu_custom_call.1']
    #allocation8 [shape = 'u8[16384]{0}', space=vmem, size = 0x4000, scoped, tag = 'input window, operand 2, single buffered']
    #allocation9 [shape = 'u8[8192]{0}', space=vmem, size = 0x2000, scoped, tag = 'input window, operand 4, single buffered']
    #allocation10 [shape = 's32[1]{0}', space=sflag, size = 0x4, scoped, tag = 'scoped memory for tpu_custom_call.1']
    #allocation11 [shape = 'u8[32768]{0}', space=vmem, size = 0x8000, scoped, tag = 'input window, operand 5, single buffered']
    #allocation12 [shape = 'u8[2048]{0}', space=vmem, size = 0x800, scoped, tag = 'output window, operand 0, single buffered']
    %11 = vsyncpa [#allocation4], 0
    %12 = vsyncpa [#allocation7], 0
    %13 = vsyncpa [#allocation10], 0
    %14 = vsyncpa [#allocation5], 0
    // Predicated region
    $region2: #{tpu_custom_call.1} parent=1 // pred_check
      _
    $region3: #{tpu_custom_call.1} parent=1 // pred_check_branch
      %16 = sbr.rel (0) target = $region5
    $region4: #{tpu_custom_call.1} parent=1 // pred_region
      %18 = vsyncadd [#allocation4], 0
      %s20 = sshll.u32 %s0, 4
      %s21 = int_to_ptr.hbm [resolvable:$true] %s20
      %s22 = sshll.u32 [#allocation3], 4
      %s23 = int_to_ptr.vmem [resolvable:$true] %s22
      %25 = dma.hbm_to_vmem [thread:$0]  %s21, 32, %s23, [#allocation4]
    $region5: #{tpu_custom_call.1} parent=1 // pred_fallthru
      _
    // Predicated region
    $region6: #{tpu_custom_call.1} parent=1 // pred_check
      _
    $region7: #{tpu_custom_call.1} parent=1 // pred_check_branch
      %27 = sbr.rel (0) target = $region9
    $region8: #{tpu_custom_call.1} parent=1 // pred_region
      %29 = vsyncadd [#allocation7], 0
      %s31 = sshll.u32 %s1, 4
      %s32 = int_to_ptr.hbm [resolvable:$true] %s31
      %s33 = sshll.u32 [#allocation6], 4
      %s34 = int_to_ptr.vmem [resolvable:$true] %s33
      %36 = dma.hbm_to_vmem [thread:$0]  %s32, 32, %s34, [#allocation7]
    $region9: #{tpu_custom_call.1} parent=1 // pred_fallthru
      _
    // Predicated region
    $region10: #{tpu_custom_call.1} parent=1 // pred_check
      _
    $region11: #{tpu_custom_call.1} parent=1 // pred_check_branch
      %38 = sbr.rel (0) target = $region13
    $region12: #{tpu_custom_call.1} parent=1 // pred_region
      %40 = vsyncadd [#allocation7], 0
      %s41 = sshll.u32 %s2, 4
      %s42 = int_to_ptr.hbm [resolvable:$true] %s41
      %s43 = sshll.u32 [#allocation8], 4
      %s44 = int_to_ptr.vmem [resolvable:$true] %s43
      %49 = dma.hbm_to_vmem [thread:$0]  %s42, 512, %s44, [#allocation7], 128, 128, 8
    $region13: #{tpu_custom_call.1} parent=1 // pred_fallthru
      _
    // Predicated region
    $region14: #{tpu_custom_call.1} parent=1 // pred_check
      _
    $region15: #{tpu_custom_call.1} parent=1 // pred_check_branch
      %51 = sbr.rel (0) target = $region17
    $region16: #{tpu_custom_call.1} parent=1 // pred_region
      _
    $region17: #{tpu_custom_call.1} parent=1 // pred_fallthru
      _
    // Predicated region
    $region18: #{tpu_custom_call.1} parent=1 // pred_check
      _
    $region19: #{tpu_custom_call.1} parent=1 // pred_check_branch
      %53 = sbr.rel (0) target = $region21
    $region20: #{tpu_custom_call.1} parent=1 // pred_region
      %55 = vsyncadd [#allocation10], 0
      %s57 = sshll.u32 %s4, 4
      %s58 = int_to_ptr.hbm [resolvable:$true] %s57
      %s59 = sshll.u32 [#allocation9], 4
      %s60 = int_to_ptr.vmem [resolvable:$true] %s59
      %62 = dma.hbm_to_vmem [thread:$0]  %s58, 256, %s60, [#allocation10]
    $region21: #{tpu_custom_call.1} parent=1 // pred_fallthru
      _
    // Predicated region
    $region22: #{tpu_custom_call.1} parent=1 // pred_check
      _
    $region23: #{tpu_custom_call.1} parent=1 // pred_check_branch
      %64 = sbr.rel (0) target = $region25
    $region24: #{tpu_custom_call.1} parent=1 // pred_region
      %66 = vsyncadd [#allocation10], 0
      %s67 = sshll.u32 %s5, 4
      %s68 = int_to_ptr.hbm [resolvable:$true] %s67
      %s69 = sshll.u32 [#allocation11], 4
      %s70 = int_to_ptr.vmem [resolvable:$true] %s69
      %75 = dma.hbm_to_vmem [thread:$0]  %s68, 1024, %s70, [#allocation10], 256, 256, 16
    $region25: #{tpu_custom_call.1} parent=1 // pred_fallthru
      _
    // Predicated region
    $region26: #{tpu_custom_call.1} parent=1 // pred_check
      _
    $region27: #{tpu_custom_call.1} parent=1 // pred_check_branch
      %77 = sbr.rel (0) target = $region29
    $region28: #{tpu_custom_call.1} parent=1 // pred_region
      %79 = dma.done [#allocation4], 32
    $region29: #{tpu_custom_call.1} parent=1 // pred_fallthru
      _
    // Predicated region
    $region30: #{tpu_custom_call.1} parent=1 // pred_check
      _
    $region31: #{tpu_custom_call.1} parent=1 // pred_check_branch
      %81 = sbr.rel (0) target = $region33
    $region32: #{tpu_custom_call.1} parent=1 // pred_region
      %83 = dma.done [#allocation7], 32
    $region33: #{tpu_custom_call.1} parent=1 // pred_fallthru
      _
    // Predicated region
    $region34: #{tpu_custom_call.1} parent=1 // pred_check
      _
    $region35: #{tpu_custom_call.1} parent=1 // pred_check_branch
      %85 = sbr.rel (0) target = $region37
    $region36: #{tpu_custom_call.1} parent=1 // pred_region
      %87 = dma.done [#allocation7], 512
    $region37: #{tpu_custom_call.1} parent=1 // pred_fallthru
      _
    // Predicated region
    $region38: #{tpu_custom_call.1} parent=1 // pred_check
      _
    $region39: #{tpu_custom_call.1} parent=1 // pred_check_branch
      %89 = sbr.rel (0) target = $region41
    $region40: #{tpu_custom_call.1} parent=1 // pred_region
      %91 = dma.done [#allocation10], 256
    $region41: #{tpu_custom_call.1} parent=1 // pred_fallthru
      _
    // Predicated region
    $region42: #{tpu_custom_call.1} parent=1 // pred_check
      _
    $region43: #{tpu_custom_call.1} parent=1 // pred_check_branch
      %93 = sbr.rel (0) target = $region45
    $region44: #{tpu_custom_call.1} parent=1 // pred_region
      %95 = dma.done [#allocation10], 1024
    $region45: #{tpu_custom_call.1} parent=1 // pred_fallthru
      _
    %p96 = scmp.eq.s32.totalorder 0, 0
    // Predicated region
    $region46: #{tpu_custom_call.1} parent=1 // pred_check
      %p97 = pneg %p96
    $region47: #{tpu_custom_call.1} parent=1 // pred_check_branch
      %99 = sbr.rel (%p97) target = $region49
    $region48: #{tpu_custom_call.1} parent=1 // pred_region
      %v100 = vld [vmem:[#allocation6] sm:$0x3]
      %v101 = vld [vmem:[#allocation8] sm:$0xff]
      %v102 = vld [vmem:[#allocation8 + $0x8] sm:$0xff]
      %v103 = vld [vmem:[#allocation8 + $0x10] sm:$0xff]
      %v104 = vld [vmem:[#allocation8 + $0x18] sm:$0xff]
      %v105 = vld [vmem:[%s3] sm:$0x1]
      %v107 = vperm.slane %v105, 0
      %vm109 = vcmask 261120
      %v111 = vsel %vm109, %v100, 0
      %113 = vmatpush.msra.mxu0 0.0
      %114 = vmatpush.msra.mxu0 0.0
      %115 = vmatpush.msra.mxu0 0.0
      %116 = vmatpush.msra.mxu0 0.0
      %117 = vmatpush.msra.mxu0 0.0
      %118 = vmatpush.msra.mxu0 0.0
      %119 = vmatpush.msra.mxu0 0.0
      %120 = vmatpush.msra.mxu0 0.0
      %121 = vmatpush.msra.mxu0 0.0
      %122 = vmatpush.msra.mxu0 0.0
      %123 = vmatpush.msra.mxu0 0.0
      %124 = vmatpush.msra.mxu0 0.0
      %125 = vmatpush.msra.mxu0 %v104
      %126 = vmatpush.msra.mxu0 %v103
      %127 = vmatpush.msra.mxu0 %v102
      %128 = vmatpush.msra.mxu0 %v101
      %129 = vmatmul.f32.gmra.mxu0 %v111
      %v130 = vpop.f32.mrf.mxu0
      %v131 = vadd.f32 %v107, %v130
      %132 = vdwg.mxu0
      %vm133 = vcmask 254976
      %134 = vst.msk [vmem:[#allocation2] sm:$0x3] %vm133, %v131
    $region49: #{tpu_custom_call.1} parent=1 // pred_fallthru
      _
    %v135 = vld [vmem:[#allocation3] sm:$0x3]
    %v136 = vld [vmem:[#allocation9] sm:$0xff]
    %v137 = vld [vmem:[#allocation9 + $0x8] sm:$0xff]
    %vm138 = vcmask 64512
    %v140 = vsel %vm138, %v135, 0
    %142 = vmatpush.msra.mxu0 0.0
    %143 = vmatpush.msra.mxu0 0.0
    %144 = vmatpush.msra.mxu0 0.0
    %145 = vmatpush.msra.mxu0 0.0
    %146 = vmatpush.msra.mxu0 0.0
    %147 = vmatpush.msra.mxu0 0.0
    %148 = vmatpush.msra.mxu0 0.0
    %149 = vmatpush.msra.mxu0 0.0
    %150 = vmatpush.msra.mxu0 0.0
    %151 = vmatpush.msra.mxu0 0.0
    %152 = vmatpush.msra.mxu0 0.0
    %153 = vmatpush.msra.mxu0 0.0
    %154 = vmatpush.msra.mxu0 0.0
    %155 = vmatpush.msra.mxu0 0.0
    %156 = vmatpush.msra.mxu0 0.0
    %157 = vmatpush.msra.mxu0 %v136
    %158 = vmatmul.f32.gmra.mxu0 %v140
    %v159 = vpop.f32.mrf.mxu0
    %v160 = vadd.f32 0.0, %v159
    %161 = vdwg.mxu0
    %162 = vmatpush.msra.mxu0 0.0
    %163 = vmatpush.msra.mxu0 0.0
    %164 = vmatpush.msra.mxu0 0.0
    %165 = vmatpush.msra.mxu0 0.0
    %166 = vmatpush.msra.mxu0 0.0
    %167 = vmatpush.msra.mxu0 0.0
    %168 = vmatpush.msra.mxu0 0.0
    %169 = vmatpush.msra.mxu0 0.0
    %170 = vmatpush.msra.mxu0 0.0
    %171 = vmatpush.msra.mxu0 0.0
    %172 = vmatpush.msra.mxu0 0.0
    %173 = vmatpush.msra.mxu0 0.0
    %174 = vmatpush.msra.mxu0 0.0
    %175 = vmatpush.msra.mxu0 0.0
    %176 = vmatpush.msra.mxu0 0.0
    %177 = vmatpush.msra.mxu0 %v137
    %178 = vmatmul.f32.gmra.mxu0 %v140
    %v179 = vpop.f32.mrf.mxu0
    %v180 = vadd.f32 0.0, %v179
    %181 = vdwg.mxu0
    %v182 = vld [vmem:[#allocation2] sm:$0x3]
    %v183 = vld [vmem:[#allocation11] sm:$0xff]
    %v184 = vld [vmem:[#allocation11 + $0x8] sm:$0xff]
    %v185 = vld [vmem:[#allocation11 + $0x10] sm:$0xff]
    %v186 = vld [vmem:[#allocation11 + $0x18] sm:$0xff]
    %v187 = vld [vmem:[#allocation11 + $0x20] sm:$0xff]
    %v188 = vld [vmem:[#allocation11 + $0x28] sm:$0xff]
    %v189 = vld [vmem:[#allocation11 + $0x30] sm:$0xff]
    %v190 = vld [vmem:[#allocation11 + $0x38] sm:$0xff]
    %vm191 = vcmask 261120
    %v193 = vsel %vm191, %v182, 0
    %195 = vmatpush.msra.mxu0 0.0
    %196 = vmatpush.msra.mxu0 0.0
    %197 = vmatpush.msra.mxu0 0.0
    %198 = vmatpush.msra.mxu0 0.0
    %199 = vmatpush.msra.mxu0 0.0
    %200 = vmatpush.msra.mxu0 0.0
    %201 = vmatpush.msra.mxu0 0.0
    %202 = vmatpush.msra.mxu0 0.0
    %203 = vmatpush.msra.mxu0 0.0
    %204 = vmatpush.msra.mxu0 0.0
    %205 = vmatpush.msra.mxu0 0.0
    %206 = vmatpush.msra.mxu0 0.0
    %207 = vmatpush.msra.mxu0 %v189
    %208 = vmatpush.msra.mxu0 %v187
    %209 = vmatpush.msra.mxu0 %v185
    %210 = vmatpush.msra.mxu0 %v183
    %211 = vmatmul.f32.gmra.mxu0 %v193
    %v212 = vpop.f32.mrf.mxu0
    %v213 = vadd.f32 0.0, %v212
    %214 = vdwg.mxu0
    %215 = vmatpush.msra.mxu0 0.0
    %216 = vmatpush.msra.mxu0 0.0
    %217 = vmatpush.msra.mxu0 0.0
    %218 = vmatpush.msra.mxu0 0.0
    %219 = vmatpush.msra.mxu0 0.0
    %220 = vmatpush.msra.mxu0 0.0
    %221 = vmatpush.msra.mxu0 0.0
    %222 = vmatpush.msra.mxu0 0.0
    %223 = vmatpush.msra.mxu0 0.0
    %224 = vmatpush.msra.mxu0 0.0
    %225 = vmatpush.msra.mxu0 0.0
    %226 = vmatpush.msra.mxu0 0.0
    %227 = vmatpush.msra.mxu0 %v190
    %228 = vmatpush.msra.mxu0 %v188
    %229 = vmatpush.msra.mxu0 %v186
    %230 = vmatpush.msra.mxu0 %v184
    %231 = vmatmul.f32.gmra.mxu0 %v193
    %v232 = vpop.f32.mrf.mxu0
    %v233 = vadd.f32 0.0, %v232
    %234 = vdwg.mxu0
    %v235 = vmul.f32 %v160, %v213
    %v236 = vmul.f32 %v180, %v233
    %v239 = vrot.slane %v236, 6
    %vm240 = vcmask 1041408
    %v241 = vsel %vm240, %v235, %v239
    %243 = vst [vmem:[#allocation12] sm:$0xf] %v241
    // Predicated region
    $region50: #{tpu_custom_call.1} parent=1 // pred_check
      _
    $region51: #{tpu_custom_call.1} parent=1 // pred_check_branch
      %245 = sbr.rel (0) target = $region53
    $region52: #{tpu_custom_call.1} parent=1 // pred_region
      %247 = vsyncadd [#allocation5], 0
      %s249 = sshll.u32 [#allocation12], 4
      %s250 = int_to_ptr.vmem [resolvable:$true] %s249
      %s251 = sshll.u32 %s6, 4
      %s252 = int_to_ptr.hbm [resolvable:$true] %s251
      %254 = dma.vmem_to_hbm [thread:$0]  %s250, 64, %s252, [#allocation5]
    $region53: #{tpu_custom_call.1} parent=1 // pred_fallthru
      _
    // Predicated region
    $region54: #{tpu_custom_call.1} parent=1 // pred_check
      _
    $region55: #{tpu_custom_call.1} parent=1 // pred_check_branch
      %256 = sbr.rel (0) target = $region57
    $region56: #{tpu_custom_call.1} parent=1 // pred_region
      %258 = dma.done [#allocation5], 64
    $region57: #{tpu_custom_call.1} parent=1 // pred_fallthru
      _
    %259 = vsyncpa [#allocation4], 1
    %260 = vsyncpa [#allocation7], 1
    %261 = vsyncpa [#allocation10], 1
    %262 = vsyncpa [#allocation5], 1

</llo_original>
